<compile_context>
chip_gen: v7x
topology: tpu7x:2x2x1
jax: 0.10.0
libtpu: 0.0.40
codegen_flags: <defaults>
</compile_context>

<pallas_src>
import functools

import jax
import jax.numpy as jnp
from jax.experimental import pallas as pl
from jax.experimental.pallas import tpu as pltpu


def _round_up(x, m):
    return ((x + m - 1) // m) * m


def _pick_tile(total_rows, row_bytes, max_tile, budget_bytes=8 << 20):
    """Largest multiple-of-8 row tile whose working set fits `budget_bytes`."""
    cap = max(8, budget_bytes // max(row_bytes, 1))
    tile = min(_round_up(total_rows, 8), max_tile, cap)
    return max(8, (tile // 8) * 8)


# ----------------------------------------------------------------------------- 
# Kernel 1: cross-entropy partial sums, tiled over rows of `logits`.
# -----------------------------------------------------------------------------
def _ce_partial_kernel(n_valid, logits_ref, target_ref, out_ref):
    i = pl.program_id(0)
    logits = logits_ref[...].astype(jnp.float32)          # (TILE_N, C)  f32 compute
    tgt = target_ref[...]                                  # (TILE_N, 1)  int32
    tn, c = logits.shape

    # Numerically stable log-sum-exp per row.
    row_max = jnp.max(logits, axis=-1, keepdims=True)
    lse = row_max + jnp.log(jnp.sum(jnp.exp(logits - row_max), axis=-1, keepdims=True))

    # Gather the target logit with a one-hot select (no dynamic gather on TPU).
    col_ids = jax.lax.broadcasted_iota(jnp.int32, (tn, c), 1)
    onehot = (col_ids == tgt).astype(jnp.float32)
    tgt_logit = jnp.sum(logits * onehot, axis=-1, keepdims=True)

    per_row = lse - tgt_logit                              # (TILE_N, 1)

    # Mask padded rows (global row index >= n_valid).
    row_ids = jax.lax.broadcasted_iota(jnp.int32, (tn, 1), 0) + i * tn
    valid = (row_ids < n_valid).astype(jnp.float32)
    partial = jnp.sum(per_row * valid)                     # scalar

    # Lane-dense per-tile partial; wrapper reads [:, 0, 0] and reduces.
    out_ref[...] = jnp.zeros_like(out_ref) + partial


# ----------------------------------------------------------------------------- 
# Kernel 2: regularizer partial sums, tiled over rows of W.
#   a_i = max_j (W @ W.T - I)[i, j],  partial = sum over this tile's rows.
# -----------------------------------------------------------------------------
def _gram_partial_kernel(c_valid, w_ref, wt_ref, out_ref):
    i = pl.program_id(0)
    w = w_ref[...]                                         # (TILE_C, D)
    wt = wt_ref[...]                                       # (D, C)  pre-transposed in wrapper
    tc = w.shape[0]
    c = wt.shape[1]

    gram = jax.lax.dot_general(                            # (TILE_C, C) on the MXU
        w, wt,
        dimension_numbers=(((1,), (0,)), ((), ())),
        preferred_element_type=jnp.float32)

    # Subtract the identity only on the diagonal (no eye materialization).
    row_ids = jax.lax.broadcasted_iota(jnp.int32, (tc, c), 0) + i * tc
    col_ids = jax.lax.broadcasted_iota(jnp.int32, (tc, c), 1)
    a = jnp.where(row_ids == col_ids, gram - 1.0, gram)

    row_max = jnp.max(a, axis=-1, keepdims=True)           # (TILE_C, 1)
    rid = jax.lax.broadcasted_iota(jnp.int32, (tc, 1), 0) + i * tc
    valid = (rid < c_valid).astype(jnp.float32)
    partial = jnp.sum(row_max * valid)

    out_ref[...] = jnp.zeros_like(out_ref) + partial


# ----------------------------------------------------------------------------- 
# Wrapper
# -----------------------------------------------------------------------------
def focal_loss(logits, target, W, gamma=0, *, max_tile_rows=512, max_tile_classes=256):
    """logits: (N, C), target: (N,) int, W: (C, D) -> scalar f32."""
    n, c = logits.shape
    c_w, d = W.shape
    assert c_w == c, "W must have `classes` rows"

    compiler_params = pltpu.CompilerParams(
        dimension_semantics=("parallel",),
        vmem_limit_bytes=32 * 1024 * 1024,
    )

    # ---------------- CE pass: grid over row tiles of logits ----------------
    logit_bytes = jnp.dtype(logits.dtype).itemsize
    tile_n = _pick_tile(n, c * (logit_bytes + 4), max_tile_rows)   # input + f32 upcast
    n_pad = _round_up(n, tile_n)
    num_n_tiles = n_pad // tile_n

    logits_p = jnp.pad(logits, ((0, n_pad - n), (0, 0)))
    target_p = jnp.pad(target.astype(jnp.int32), ((0, n_pad - n),)).reshape(n_pad, 1)

    ce_cost = pl.CostEstimate(
        flops=5 * n_pad * c,
        transcendentals=n_pad * (c + 1),
        bytes_accessed=n_pad * c * logit_bytes + n_pad * 4 + num_n_tiles * 8 * 128 * 4,
    )

    ce_parts = pl.pallas_call(
        functools.partial(_ce_partial_kernel, n),
        out_shape=jax.ShapeDtypeStruct((num_n_tiles, 8, 128), jnp.float32),
        grid=(num_n_tiles,),
        in_specs=[
            pl.BlockSpec((tile_n, c), lambda i: (i, 0)),
            pl.BlockSpec((tile_n, 1), lambda i: (i, 0)),
        ],
        out_specs=pl.BlockSpec((1, 8, 128), lambda i: (i, 0, 0)),
        compiler_params=compiler_params,
        cost_estimate=ce_cost,
    )(logits_p, target_p)

    # ---------------- Gram pass: grid over row tiles of W -------------------
    w_bytes = jnp.dtype(W.dtype).itemsize
    # Per-row working set: W row (D) + one Gram row (C) in f32, double-buffered-ish.
    tile_c = _pick_tile(c, (d + c) * 4 * 2, max_tile_classes)
    c_pad = _round_up(c, tile_c)
    num_c_tiles = c_pad // tile_c

    w_p = jnp.pad(W, ((0, c_pad - c), (0, 0)))
    wt = W.T                                                # (D, C): wrapper-side transpose

    gram_cost = pl.CostEstimate(
        flops=2 * c_pad * c * d,
        transcendentals=0,
        bytes_accessed=(c_pad * d + d * c) * w_bytes + num_c_tiles * 8 * 128 * 4,
    )

    gram_parts = pl.pallas_call(
        functools.partial(_gram_partial_kernel, c),
        out_shape=jax.ShapeDtypeStruct((num_c_tiles, 8, 128), jnp.float32),
        grid=(num_c_tiles,),
        in_specs=[
            pl.BlockSpec((tile_c, d), lambda i: (i, 0)),
            pl.BlockSpec((d, c), lambda i: (0, 0)),
        ],
        out_specs=pl.BlockSpec((1, 8, 128), lambda i: (i, 0, 0)),
        compiler_params=compiler_params,
        cost_estimate=gram_cost,
    )(w_p, wt)

    # ---------------- Scalar epilogue (cheap; done outside the kernels) -----
    logp = jnp.sum(ce_parts[:, 0, 0]) / jnp.float32(n)      # CE with mean reduction
    p = jnp.exp(-logp)
    focal = (1.0 - p) ** gamma * logp

    a_term = jnp.sum(gram_parts[:, 0, 0]) * (12.0 / c)

    # The PyTorch module prints the tuple before returning the sum.
    jax.debug.print("({}, {})", focal, a_term)
    return focal + a_term


def _reference(logits, target, W, gamma=0):
    """Pure-JAX reference for sanity checking."""
    lse = jax.nn.logsumexp(logits, axis=-1)
    logp = jnp.mean(lse - jnp.take_along_axis(logits, target[:, None], axis=1)[:, 0])
    p = jnp.exp(-logp)
    loss = (1.0 - p) ** gamma * logp
    c = W.shape[0]
    a = W @ W.T - jnp.eye(c, dtype=W.dtype)
    a = jnp.sum(jnp.max(a, axis=1))
    return loss + a * 12.0 / c


if __name__ == "__main__":
    key = jax.random.PRNGKey(0)
    k1, k2, k3 = jax.random.split(key, 3)

    # Small but deliberately non-aligned shapes so the padding/masking and the
    # multi-tile grid paths are exercised (N=100 -> 4 tiles of 32 rows).
    N, C, D = 100, 12, 32

    logits = jax.random.normal(k1, (N, C), dtype=jnp.float32)
    target = jax.random.randint(k2, (N,), 0, C, dtype=jnp.int32)
    W = jax.random.normal(k3, (C, D), dtype=jnp.float32) * 0.1

    for gamma in (0, 2):
        out = jax.block_until_ready(
            focal_loss(logits, target, W, gamma=gamma, max_tile_rows=32))
        ref = _reference(logits, target, W, gamma=gamma)
        assert jnp.allclose(out, ref, rtol=1e-5, atol=1e-5), (gamma, out, ref)

    print("KERNEL_OK")
</pallas_src>

<mosaic_0001>
module attributes {stable_mosaic.version = 11 : i64} {
  func.func @_ce_partial_kernel(%arg0: i32, %arg1: memref<32x12xf32, #tpu.memory_space<vmem>>, %arg2: memref<32x1xi32, #tpu.memory_space<vmem>>, %arg3: memref<1x8x128xf32, #tpu.memory_space<vmem>>) attributes {dimension_semantics = [#tpu.dimension_semantics<parallel>], iteration_bounds = array<i64: 4>, scalar_prefetch = 0 : i64, scratch_operands = 0 : i64, tpu.core_type = #tpu.core_type<tc>, window_params = [{transform_indices = @transform_0, window_bounds = array<i64: 32, 12>}, {transform_indices = @transform_1, window_bounds = array<i64: 32, 1>}, {transform_indices = @transform_2, window_bounds = array<i64: 1, 8, 128>}]} {
    %c0 = arith.constant 0 : index
    %c0_0 = arith.constant 0 : index
    %0 = vector.load %arg1[%c0, %c0_0] : memref<32x12xf32, #tpu.memory_space<vmem>>, vector<32x12xf32>
    %c0_1 = arith.constant 0 : index
    %c0_2 = arith.constant 0 : index
    %1 = vector.load %arg2[%c0_1, %c0_2] : memref<32x1xi32, #tpu.memory_space<vmem>>, vector<32x1xi32>
    %cst = arith.constant dense<0xFF800000> : vector<32xf32>
    %2 = vector.multi_reduction <maximumf>, %0, %cst [1] : vector<32x12xf32> to vector<32xf32>
    %3 = vector.shape_cast %2 : vector<32xf32> to vector<32x1xf32>
    %4 = vector.broadcast %3 : vector<32x1xf32> to vector<32x12xf32>
    %5 = arith.subf %0, %4 : vector<32x12xf32>
    %6 = math.exp %5 : vector<32x12xf32>
    %cst_3 = arith.constant dense<0.000000e+00> : vector<32xf32>
    %7 = vector.multi_reduction <add>, %6, %cst_3 [1] : vector<32x12xf32> to vector<32xf32>
    %8 = vector.shape_cast %7 : vector<32xf32> to vector<32x1xf32>
    %9 = math.log %8 : vector<32x1xf32>
    %10 = arith.addf %3, %9 : vector<32x1xf32>
    %11 = tpu.iota {dimensions = array<i32: 1>} : vector<32x12xi32>
    %12 = vector.broadcast %1 : vector<32x1xi32> to vector<32x12xi32>
    %13 = arith.cmpi eq, %11, %12 : vector<32x12xi32>
    %14 = arith.extui %13 : vector<32x12xi1> to vector<32x12xi32>
    %15 = arith.sitofp %14 : vector<32x12xi32> to vector<32x12xf32>
    %16 = arith.mulf %0, %15 : vector<32x12xf32>
    %cst_4 = arith.constant dense<0.000000e+00> : vector<32xf32>
    %17 = vector.multi_reduction <add>, %16, %cst_4 [1] : vector<32x12xf32> to vector<32xf32>
    %18 = vector.shape_cast %17 : vector<32xf32> to vector<32x1xf32>
    %19 = arith.subf %10, %18 : vector<32x1xf32>
    %20 = tpu.iota {dimensions = array<i32: 0>} : vector<32x1xi32>
    %c32_i32 = arith.constant 32 : i32
    %21 = arith.muli %arg0, %c32_i32 : i32
    %22 = vector.broadcast %21 : i32 to vector<32x1xi32>
    %23 = arith.addi %20, %22 : vector<32x1xi32>
    %c100_i32 = arith.constant 100 : i32
    %24 = vector.broadcast %c100_i32 : i32 to vector<32x1xi32>
    %25 = arith.cmpi slt, %23, %24 : vector<32x1xi32>
    %26 = arith.extui %25 : vector<32x1xi1> to vector<32x1xi32>
    %27 = arith.sitofp %26 : vector<32x1xi32> to vector<32x1xf32>
    %28 = arith.mulf %19, %27 : vector<32x1xf32>
    %29 = vector.shape_cast %28 : vector<32x1xf32> to vector<1x32x1xf32>
    %cst_5 = arith.constant dense<0.000000e+00> : vector<1xf32>
    %30 = vector.multi_reduction <add>, %29, %cst_5 [1, 2] : vector<1x32x1xf32> to vector<1xf32>
    %31 = vector.shape_cast %30 : vector<1xf32> to vector<1x1x1xf32>
    %32 = vector.extract %31[0, 0, 0] : f32 from vector<1x1x1xf32>
    %cst_6 = arith.constant 0.000000e+00 : f32
    %33 = vector.broadcast %cst_6 : f32 to vector<1x8x128xf32>
    %34 = vector.broadcast %32 : f32 to vector<1x8x128xf32>
    %35 = arith.addf %33, %34 : vector<1x8x128xf32>
    %c0_7 = arith.constant 0 : index
    %c0_8 = arith.constant 0 : index
    %c0_9 = arith.constant 0 : index
    %36 = vector.load %arg3[%c0_7, %c0_8, %c0_9] : memref<1x8x128xf32, #tpu.memory_space<vmem>>, vector<1x8x128xf32>
    tpu.vector_store %arg3[%c0_7, %c0_8, %c0_9], %35 {strides = array<i32>} : memref<1x8x128xf32, #tpu.memory_space<vmem>>, vector<1x8x128xf32>,
    return
  }
  func.func @transform_0(%arg0: i32) -> (i32, i32) {
    %c0_i32 = arith.constant 0 : i32
    %c0_i32_0 = arith.constant 0 : i32
    return %arg0, %c0_i32 : i32, i32
  }
  func.func @transform_1(%arg0: i32) -> (i32, i32) {
    %c0_i32 = arith.constant 0 : i32
    %c0_i32_0 = arith.constant 0 : i32
    return %arg0, %c0_i32 : i32, i32
  }
  func.func @transform_2(%arg0: i32) -> (i32, i32, i32) {
    %c0_i32 = arith.constant 0 : i32
    %c0_i32_0 = arith.constant 0 : i32
    %c0_i32_1 = arith.constant 0 : i32
    return %arg0, %c0_i32, %c0_i32_0 : i32, i32, i32
  }
}

</mosaic_0001>

<llo_original>
// kernel: tpu_custom_call.1
$region0: #{tpu_custom_call.1}
  #allocation0 [shape = 'u32[]', space=smem, size = 0x4, offset = 0x4, fixed_abs, tag = 'smem constant byte address 0x4 - core index']
  #allocation1 [shape = 'u32[144,128]{1,0:T(1,128)}', space=vmem, size = 0x12000, scoped, tag = 'internal scratch']
  %s0 = inlined_call_operand.vmem [shape: f32[128,12], index: 0, kind: input, shape index: {}]
  %s1 = inlined_call_operand.vmem [shape: s32[128,1], index: 1, kind: input, shape index: {}]
  %s2 = inlined_call_operand.hbm [shape: f32[4,8,128], index: 2, kind: output, shape index: {}]
  %s3 = sld [smem:[#allocation0]]
  $region41: #{tpu_custom_call.1} parent=0
    _
  %s5 = ssub.s32 1, %s3
  %s6 = scalar_select 0, %s5, %s3
  $region1: #{tpu_custom_call.1} parent=0
    #allocation2 [shape = 'u8[8192]{0}', space=vmem, size = 0x2000, scoped, tag = 'output window, operand 0']
    #allocation3 [shape = 's32[2]{0}', space=sflag, size = 0x8, scoped, tag = 'scoped memory for tpu_custom_call.1']
    %7 = vsyncpa [#allocation3], 0
    %s8 = scalar_lea.sflag [#allocation3], 1
    %9 = vsyncpa %s8, 0
    loop: start=0, step=1, limit=6
    $region2: #{tpu_custom_call.1} parent=1 // loop_pre_header
      _
    $region3: #{tpu_custom_call.1} parent=1 // loop_header
      %s11 = sphi 0, %s15
      %p12 = scmp.ge.s32.totalorder %s11, 6
      %s21 = sphi 0, %s23
      %s24 = sphi 0, %s21
      %s25 = sphi 0, %s24
      %s41 = sphi 0, %s25
      %s47 = sphi 0, %s49
      %s50 = sphi 0, %s47
      %s51 = sphi 0, %s50
      %s67 = sphi 0, %s51
      %s73 = sphi 0, %s75
      %s76 = sphi 0, %s73
      %s77 = sphi 0, %s76
      %s93 = sphi 0, %s77
    $region4: #{tpu_custom_call.1} parent=1 // loop_header_branch
      %14 = sbr.rel (%p12) target = $region8
    $region5: #{tpu_custom_call.1} parent=1 // loop_body
      %s16 = ssub.s32 %s11, 1
      %s17 = ssub.s32 %s11, 2
      %s18 = sadd.s32 %s11, 1
      %s19 = ssub.s32 %s11, %s18
      %p20 = scmp.eq.s32.totalorder %s19, 0
      %s22 = sadd.s32 %s21, 1
      %s23 = scalar_select %p20, %s21, %s22
      %p26 = pneg %p20
      %p27 = scmp.eq.s32.totalorder %s11, 3
      %p28 = por %p26, %p27
      %p29 = scmp.ne.s32.totalorder %s21, %s24
      %p30 = scmp.eq.s32.totalorder %s11, 0
      %p31 = por %p29, %p30
      %p32 = scmp.ne.s32.totalorder %s21, %s24
      %p33 = scmp.eq.s32.totalorder %s16, 3
      %p34 = por %p32, %p33
      %p35 = scmp.ne.s32.totalorder %s24, %s25
      %p36 = scmp.eq.s32.totalorder %s16, 0
      %p37 = por %p35, %p36
      %p38 = scmp.ne.s32.totalorder %s24, %s25
      %p39 = scmp.eq.s32.totalorder %s17, 3
      %p40 = por %p38, %p39
      %p42 = scmp.ne.s32.totalorder %s25, %s41
      %p43 = scmp.eq.s32.totalorder %s17, 0
      %p44 = por %p42, %p43
      %s45 = ssub.s32 %s11, %s18
      %p46 = scmp.eq.s32.totalorder %s45, 0
      %s48 = sadd.s32 %s47, 1
      %s49 = scalar_select %p46, %s47, %s48
      %p52 = pneg %p46
      %p53 = scmp.eq.s32.totalorder %s11, 3
      %p54 = por %p52, %p53
      %p55 = scmp.ne.s32.totalorder %s47, %s50
      %p56 = scmp.eq.s32.totalorder %s11, 0
      %p57 = por %p55, %p56
      %p58 = scmp.ne.s32.totalorder %s47, %s50
      %p59 = scmp.eq.s32.totalorder %s16, 3
      %p60 = por %p58, %p59
      %p61 = scmp.ne.s32.totalorder %s50, %s51
      %p62 = scmp.eq.s32.totalorder %s16, 0
      %p63 = por %p61, %p62
      %p64 = scmp.ne.s32.totalorder %s50, %s51
      %p65 = scmp.eq.s32.totalorder %s17, 3
      %p66 = por %p64, %p65
      %p68 = scmp.ne.s32.totalorder %s51, %s67
      %p69 = scmp.eq.s32.totalorder %s17, 0
      %p70 = por %p68, %p69
      %s71 = ssub.s32 %s11, %s18
      %p72 = scmp.eq.s32.totalorder %s71, 0
      %s74 = sadd.s32 %s73, 1
      %s75 = scalar_select %p72, %s73, %s74
      %p78 = pneg %p72
      %p79 = scmp.eq.s32.totalorder %s11, 3
      %p80 = por %p78, %p79
      %p81 = scmp.ne.s32.totalorder %s73, %s76
      %p82 = scmp.eq.s32.totalorder %s11, 0
      %p83 = por %p81, %p82
      %p84 = scmp.ne.s32.totalorder %s73, %s76
      %p85 = scmp.eq.s32.totalorder %s16, 3
      %p86 = por %p84, %p85
      %p87 = scmp.ne.s32.totalorder %s76, %s77
      %p88 = scmp.eq.s32.totalorder %s16, 0
      %p89 = por %p87, %p88
      %p90 = scmp.ne.s32.totalorder %s76, %s77
      %p91 = scmp.eq.s32.totalorder %s17, 3
      %p92 = por %p90, %p91
      %p94 = scmp.ne.s32.totalorder %s77, %s93
      %p95 = scmp.eq.s32.totalorder %s17, 0
      %p96 = por %p94, %p95
      %p97 = scmp.le.s32.totalorder 1, %s11
      %p98 = scmp.lt.s32.totalorder %s11, 5
      %p99 = pnand %p97, %p98
      %p100 = pneg %p99
      // Predicated region
      $region9: #{tpu_custom_call.1} parent=5 // pred_check
        _
      $region10: #{tpu_custom_call.1} parent=5 // pred_check_branch
        %102 = sbr.rel (%p99) target = $region12
      $region11: #{tpu_custom_call.1} parent=5 // pred_region
        %s103 = ssub.s32 %s11, 1
      $region12: #{tpu_custom_call.1} parent=5 // pred_fallthru
        _
      %p104 = scmp.lt.s32.totalorder %s11, 4
      // Predicated region
      $region13: #{tpu_custom_call.1} parent=5 // pred_check
        %p105 = pneg %p104
      $region14: #{tpu_custom_call.1} parent=5 // pred_check_branch
        %107 = sbr.rel (%p105) target = $region16
      $region15: #{tpu_custom_call.1} parent=5 // pred_region
        // Predicated region
        $region17: #{tpu_custom_call.1} parent=15 // pred_check
          %p108 = pneg %p31
        $region18: #{tpu_custom_call.1} parent=15 // pred_check_branch
          %110 = sbr.rel (%p108) target = $region20
        $region19: #{tpu_custom_call.1} parent=15 // pred_region
          %s111 = smul.u32 4, %s11
          %p112 = scmp.lt.s32.totalorder %s111, 15
          %s113 = scalar_select %p112, %s111, 15
          %s114 = smul.addr %s113, 8
          %s115 = scalar_lea.vmem %s0, %s114
          %s116 = smul.u32 4, %s11
        $region20: #{tpu_custom_call.1} parent=15 // pred_fallthru
          _
        // Predicated region
        $region21: #{tpu_custom_call.1} parent=15 // pred_check
          %p117 = pneg %p57
        $region22: #{tpu_custom_call.1} parent=15 // pred_check_branch
          %119 = sbr.rel (%p117) target = $region24
        $region23: #{tpu_custom_call.1} parent=15 // pred_region
          %s120 = smul.u32 4, %s11
          %p121 = scmp.lt.s32.totalorder %s120, 15
          %s122 = scalar_select %p121, %s120, 15
          %s123 = smul.addr %s122, 8
          %s124 = scalar_lea.vmem %s1, %s123
          %s125 = smul.u32 4, %s11
        $region24: #{tpu_custom_call.1} parent=15 // pred_fallthru
          _
      $region16: #{tpu_custom_call.1} parent=5 // pred_fallthru
        _
      %p126 = scmp.le.s32.totalorder 1, %s11
      %p127 = scmp.lt.s32.totalorder %s11, 5
      %p128 = pnand %p126, %p127
      %p129 = pneg %p128
      // Predicated region
      $region25: #{tpu_custom_call.1} parent=5 // pred_check
        _
      $region26: #{tpu_custom_call.1} parent=5 // pred_check_branch
        %131 = sbr.rel (%p128) target = $region28
      $region27: #{tpu_custom_call.1} parent=5 // pred_region
        %s132 = ssub.s32 %s11, 1
        %s133 = smul.u32 4, %s16
        %p134 = scmp.lt.s32.totalorder %s133, 15
        %s135 = scalar_select %p134, %s133, 15
        %s136 = smul.addr %s135, 8
        %s137 = scalar_lea.vmem %s0, %s136
        %p138 = pneg %p37
        %p139 = pneg %p34
        %s140 = smul.u32 4, %s16
        %p141 = scmp.lt.s32.totalorder %s140, 15
        %s142 = scalar_select %p141, %s140, 15
        %s143 = smul.addr %s142, 8
        %s144 = scalar_lea.vmem %s1, %s143
        %p145 = pneg %p63
        %p146 = pneg %p60
        %p147 = pneg %p89
        %p148 = pneg %p86
        %s149 = sand.u32 %s76, 1
        %s150 = scalar_lea.sflag [#allocation3], %s149
        %s151 = sand.u32 %s76, 1
        %s152 = smul.addr %s151, 8
        %s153 = scalar_lea.vmem [#allocation2], %s152
        %s154 = smul.u32 4, %s16
        %p155 = scmp.lt.s32.totalorder %s154, 15
        %s156 = scalar_select %p155, %s154, 15
        %s157 = smul.addr %s156, 8
        %s158 = scalar_lea.vmem %s0, %s157
        %s159 = smul.u32 4, %s16
        %s160 = smul.u32 4, %s16
        %p161 = scmp.lt.s32.totalorder %s160, 15
        %s162 = scalar_select %p161, %s160, 15
        %s163 = smul.addr %s162, 8
        %s164 = scalar_lea.vmem %s1, %s163
        %s165 = smul.u32 4, %s16
        %v166 = vld [vmem:[%s158] sm:$0xff]
        %v167 = vld [vmem:[%s158 + $0x8] sm:$0xff]
        %v168 = vld [vmem:[%s158 + $0x10] sm:$0xff]
        %v169 = vld [vmem:[%s158 + $0x18] sm:$0xff]
        %v170 = vld [vmem:[%s164] sm:$0xff]
        %v171 = vld [vmem:[%s164 + $0x8] sm:$0xff]
        %v172 = vld [vmem:[%s164 + $0x10] sm:$0xff]
        %v173 = vld [vmem:[%s164 + $0x18] sm:$0xff]
        %vm174 = vcmask 97280
        %v175 = vsel %vm174, %v166, -inf
        %176 = vmax.xlane.f32.xlu0 %v175
        %v177 = vpop.xlane.xlu0 %176
        %v178 = vsel %vm174, %v167, -inf
        %179 = vmax.xlane.f32.xlu0 %v178
        %v180 = vpop.xlane.xlu0 %179
        %v181 = vsel %vm174, %v168, -inf
        %182 = vmax.xlane.f32.xlu0 %v181
        %v183 = vpop.xlane.xlu0 %182
        %v184 = vsel %vm174, %v169, -inf
        %185 = vmax.xlane.f32.xlu0 %v184
        %v186 = vpop.xlane.xlu0 %185
        %v187 = vsub.f32 %v166, %v177
        %v188 = vsub.f32 %v167, %v180
        %v189 = vsub.f32 %v168, %v183
        %v190 = vsub.f32 %v169, %v186
        %v191 = vmul.f32 %v187, 1.442695
        %v192 = vpow.pop %v191
        %v193 = vmul.f32 %v188, 1.442695
        %v194 = vpow.pop %v193
        %v195 = vmul.f32 %v189, 1.442695
        %v196 = vpow.pop %v195
        %v197 = vmul.f32 %v190, 1.442695
        %v198 = vpow.pop %v197
        %v199 = vsel %vm174, %v192, 0.0
        %200 = vadd.xlane.f32.xlu0 %v199
        %v201 = vpop.xlane.xlu0 %200
        %v202 = vsel %vm174, %v194, 0.0
        %203 = vadd.xlane.f32.xlu0 %v202
        %v204 = vpop.xlane.xlu0 %203
        %v205 = vsel %vm174, %v196, 0.0
        %206 = vadd.xlane.f32.xlu0 %v205
        %v207 = vpop.xlane.xlu0 %206
        %v208 = vsel %vm174, %v198, 0.0
        %209 = vadd.xlane.f32.xlu0 %v208
        %v210 = vpop.xlane.xlu0 %209
        %v211 = vlog2.pop %v201
        %v212 = vmul.f32 %v211, 0.6931472
        %v213 = vlog2.pop %v204
        %v214 = vmul.f32 %v213, 0.6931472
        %v215 = vlog2.pop %v207
        %v216 = vmul.f32 %v215, 0.6931472
        %v217 = vlog2.pop %v210
        %v218 = vmul.f32 %v217, 0.6931472
        %v219 = vadd.f32 %v177, %v212
        %v220 = vadd.f32 %v180, %v214
        %v221 = vadd.f32 %v183, %v216
        %v222 = vadd.f32 %v186, %v218
        %v223 = vlaneseq
        %v224 = vand.u32 %v223, 127
        %225 = vset.pattern.permute.xlu0 0
        %226 = vperm.xlu0 %225, %v170
        %v227 = vpop.permute.xlu0 %226
        %228 = vset.pattern.permute.xlu0 0
        %229 = vperm.xlu0 %228, %v171
        %v230 = vpop.permute.xlu0 %229
        %231 = vset.pattern.permute.xlu0 0
        %232 = vperm.xlu0 %231, %v172
        %v233 = vpop.permute.xlu0 %232
        %234 = vset.pattern.permute.xlu0 0
        %235 = vperm.xlu0 %234, %v173
        %v236 = vpop.permute.xlu0 %235
        %vm237 = vcmp.eq.s32.totalorder %v224, %v227
        %vm238 = vcmp.eq.s32.totalorder %v224, %v230
        %vm239 = vcmp.eq.s32.totalorder %v224, %v233
        %vm240 = vcmp.eq.s32.totalorder %v224, %v236
        %v241 = vsel %vm237, 1, 0
        %v242 = vsel %vm238, 1, 0
        %v243 = vsel %vm239, 1, 0
        %v244 = vsel %vm240, 1, 0
        %v245 = vcvt.s32.f32 %v241
        %v246 = vcvt.s32.f32 %v242
        %v247 = vcvt.s32.f32 %v243
        %v248 = vcvt.s32.f32 %v244
        %v249 = vmul.f32 %v166, %v245
        %v250 = vmul.f32 %v167, %v246
        %v251 = vmul.f32 %v168, %v247
        %v252 = vmul.f32 %v169, %v248
        %v253 = vsel %vm174, %v249, 0.0
        %254 = vadd.xlane.f32.xlu0 %v253
        %v255 = vpop.xlane.xlu0 %254
        %v256 = vsel %vm174, %v250, 0.0
        %257 = vadd.xlane.f32.xlu0 %v256
        %v258 = vpop.xlane.xlu0 %257
        %v259 = vsel %vm174, %v251, 0.0
        %260 = vadd.xlane.f32.xlu0 %v259
        %v261 = vpop.xlane.xlu0 %260
        %v262 = vsel %vm174, %v252, 0.0
        %263 = vadd.xlane.f32.xlu0 %v262
        %v264 = vpop.xlane.xlu0 %263
        %v265 = vsub.f32 %v219, %v255
        %v266 = vsub.f32 %v220, %v258
        %v267 = vsub.f32 %v221, %v261
        %v268 = vsub.f32 %v222, %v264
        %v269 = vlaneseq
        %v270 = vshrl.u32 %v269, 7
        %v271 = vadd.s32 %v270, 8
        %v272 = vadd.s32 %v270, 16
        %v273 = vadd.s32 %v270, 24
        %s274 = smul.u32 %s16, 32
        %v275 = vstv %s274
        %v276 = vadd.s32 %v270, %v275
        %v277 = vadd.s32 %v271, %v275
        %v278 = vadd.s32 %v272, %v275
        %v279 = vadd.s32 %v273, %v275
        %vm280 = vcmp.lt.s32.totalorder %v276, 100
        %vm281 = vcmp.lt.s32.totalorder %v277, 100
        %vm282 = vcmp.lt.s32.totalorder %v278, 100
        %vm283 = vcmp.lt.s32.totalorder %v279, 100
        %v284 = vsel %vm280, 1, 0
        %v285 = vsel %vm281, 1, 0
        %v286 = vsel %vm282, 1, 0
        %v287 = vsel %vm283, 1, 0
        %v288 = vcvt.s32.f32 %v284
        %v289 = vcvt.s32.f32 %v285
        %v290 = vcvt.s32.f32 %v286
        %v291 = vcvt.s32.f32 %v287
        %v292 = vmul.f32 %v265, %v288
        %v293 = vmul.f32 %v266, %v289
        %v294 = vmul.f32 %v267, %v290
        %v295 = vmul.f32 %v268, %v291
        %vm296 = vcmask 7168
        %v297 = vsel %vm296, %v292, 0.0
        %v298 = vsel %vm296, %v293, 0.0
        %v299 = vadd.f32 %v297, %v298
        %v300 = vsel %vm296, %v294, 0.0
        %v301 = vadd.f32 %v299, %v300
        %v302 = vsel %vm296, %v295, 0.0
        %v303 = vadd.f32 %v301, %v302
        %304 = vadd.xlane.f32.xlu0 %v303
        %v305 = vpop.xlane.xlu0 %304
        %v306 = vrot.slane %v305, 4
        %v307 = vadd.f32 %v305, %v306
        %v308 = vrot.slane %v307, 2
        %v309 = vadd.f32 %v307, %v308
        %v310 = vrot.slane %v309, 1
        %v311 = vadd.f32 %v309, %v310
        %s312 = vtos %v311
        %v313 = vstv %s312
        %v314 = vadd.f32 %v313, 0.0
        %315 = vst [vmem:[%s153] sm:$0xff] %v314
        %s316 = sand.u32 %s76, 1
        %s317 = scalar_lea.sflag [#allocation3], %s316
        %s318 = sand.u32 %s76, 1
        %s319 = smul.addr %s318, 8
        %s320 = scalar_lea.vmem [#allocation2], %s319
        // Predicated region
        $region29: #{tpu_custom_call.1} parent=27 // pred_check
          %p321 = pneg %p86
        $region30: #{tpu_custom_call.1} parent=27 // pred_check_branch
          %323 = sbr.rel (%p321) target = $region32
        $region31: #{tpu_custom_call.1} parent=27 // pred_region
          %s325 = ssub.s32 128, 128
          %326 = vsyncadd %s317, %s325
          %s327 = smul.addr %s16, 128
          %s328 = scalar_lea.hbm %s2, %s327
          %s330 = sshll.u32 %s320, 4
          %s331 = int_to_ptr.vmem [resolvable:$true] %s330
          %333 = dma.vmem_to_hbm [thread:$0]  %s331, 128, %s328, %s317
        $region32: #{tpu_custom_call.1} parent=27 // pred_fallthru
          _
      $region28: #{tpu_custom_call.1} parent=5 // pred_fallthru
        _
      %p334 = scmp.le.s32.totalorder 2, %s11
      // Predicated region
      $region33: #{tpu_custom_call.1} parent=5 // pred_check
        %p335 = pneg %p334
      $region34: #{tpu_custom_call.1} parent=5 // pred_check_branch
        %337 = sbr.rel (%p335) target = $region36
      $region35: #{tpu_custom_call.1} parent=5 // pred_region
        %s338 = ssub.s32 %s11, 2
        // Predicated region
        $region37: #{tpu_custom_call.1} parent=35 // pred_check
          %p339 = pneg %p92
        $region38: #{tpu_custom_call.1} parent=35 // pred_check_branch
          %341 = sbr.rel (%p339) target = $region40
        $region39: #{tpu_custom_call.1} parent=35 // pred_region
          %s342 = sand.u32 %s77, 1
          %s343 = scalar_lea.sflag [#allocation3], %s342
          %s344 = sand.u32 %s77, 1
          %s345 = smul.addr %s344, 8
          %s346 = scalar_lea.vmem [#allocation2], %s345
          %347 = dma.done %s343, 128
        $region40: #{tpu_custom_call.1} parent=35 // pred_fallthru
          _
      $region36: #{tpu_custom_call.1} parent=5 // pred_fallthru
        _
    $region6: #{tpu_custom_call.1} parent=1 // loop_footer
      %s15 = sadd.s32 1, %s11
    $region7: #{tpu_custom_call.1} parent=1 // loop_footer_branch
      %10 = sbr.rel target = $region3
    $region8: #{tpu_custom_call.1} parent=1 // loop_exit
      _
    %348 = vsyncpa [#allocation3], 1
    %s349 = scalar_lea.sflag [#allocation3], 1
    %350 = vsyncpa %s349, 1

</llo_original>
